<compile_context>
chip_gen: v6e
topology: v6e:2x2x1
jax: 0.10.0
libtpu: 0.0.40
codegen_flags: <defaults>
</compile_context>

<pallas_src>
import functools

import jax
import jax.numpy as jnp
from jax import lax
from jax.experimental import pallas as pl
from jax.experimental.pallas import tpu as pltpu

Z_DIM = 3
U_DIM = 2
X_DIM = 4
W_DIM = 6
H_DIM = 128
M = 16
IN_DIM = Z_DIM + X_DIM + U_DIM        # 9  fused input  [z | x | u]
H3 = 3 * H_DIM                        # 384 fused hidden (f | mu | sigma)
HEAD = M + 2 * W_DIM                  # 28  fused heads  [logits | w_mu | w_sig]
V_DIM = Z_DIM + U_DIM + W_DIM         # 11  transition input [z | u | w]
QCOLS = Z_DIM * V_DIM                 # 33  row-interleaved [A|B|C] width
OUT_PACK = 16                         # 3 + 6 + 6 padded to 16 output lanes
BN_EPS = 1e-5


def bayes_filter_kernel(
    z0_ref, u_ref, x_ref, eps_ref, ulow_ref, uhigh_ref,
    W1_ref, b1_ref, g_ref, beta_ref, W2_ref, b2_ref, q_ref,
    out_ref, z_carry,
):
    t = pl.program_id(0)

    @pl.when(t == 0)
    def _():
        z_carry[...] = z0_ref[...]

    z = z_carry[...]                                             # (B, 3)
    x = x_ref[...]                                               # (B, 4)
    eps = eps_ref[...]                                           # (B, 6)
    u = jnp.maximum(jnp.minimum(u_ref[...], uhigh_ref[...]), ulow_ref[...])

    # ---- fused first layer: one K=9, N=384 matmul for all three nets ----
    zxu = jnp.concatenate([z, x, u], axis=1)                     # (B, 9)
    h = jnp.dot(zxu, W1_ref[...], preferred_element_type=jnp.float32) + b1_ref[...]
    h = jax.nn.sigmoid(h)

    # BatchNorm1d, training mode (biased batch variance), single-pass stats.
    mean = jnp.mean(h, axis=0, keepdims=True)
    var = jnp.mean(h * h, axis=0, keepdims=True) - mean * mean
    h = (h - mean) * lax.rsqrt(var + BN_EPS) * g_ref[...] + beta_ref[...]

    # ---- fused second layer: block-diagonal (384, 28) -> one matmul ----
    heads = jnp.dot(h, W2_ref[...], preferred_element_type=jnp.float32) + b2_ref[...]

    logits = heads[:, :M]
    logits = logits - jnp.max(logits, axis=-1, keepdims=True)
    e = jnp.exp(logits)
    alpha = e * pl.reciprocal(jnp.sum(e, axis=-1, keepdims=True), approx=True)  # (B, 16)

    w_mu = heads[:, M:M + W_DIM]
    w_sig = jax.nn.softplus(heads[:, M + W_DIM:])
    w = w_mu + w_sig * eps                                       # rsample

    # ---- locally linear transition: z' = A z + B u + C w (alpha-mixed) ----
    # q_ref is (16, 33) with row i of [A|B|C] in lanes i*11:(i+1)*11.
    v = jnp.concatenate([z, u, w], axis=1)                       # (B, 11)
    mixed = jnp.dot(alpha, q_ref[...], preferred_element_type=jnp.float32)  # (B, 33)
    prod = mixed * jnp.concatenate([v, v, v], axis=1)            # (B, 33)
    z_next = jnp.concatenate(
        [jnp.sum(prod[:, i * V_DIM:(i + 1) * V_DIM], axis=1, keepdims=True)
         for i in range(Z_DIM)], axis=1)                         # (B, 3)

    z_carry[...] = z_next

    pad = jnp.zeros((z_next.shape[0], OUT_PACK - Z_DIM - 2 * W_DIM), jnp.float32)
    out_ref[...] = jnp.concatenate([z_next, w_mu, w_sig, pad], axis=1)


def bayes_filter_rollout(z0, u_seq, x_seq, eps_seq, fp):
    """Apply T BayesFilter.forward steps in ONE pallas_call (weights stay in VMEM)."""
    T, B = u_seq.shape[0], u_seq.shape[1]

    def full2d(a):
        return pl.BlockSpec(a.shape, lambda t: (0, 0))           # resident every step

    def seq(d):
        return pl.BlockSpec((None, B, d), lambda t: (t, 0, 0))   # streamed per step

    out = pl.pallas_call(
        bayes_filter_kernel,
        out_shape=jax.ShapeDtypeStruct((T, B, OUT_PACK), jnp.float32),
        grid=(T,),
        in_specs=[
            full2d(z0), seq(U_DIM), seq(X_DIM), seq(W_DIM),
            full2d(fp["u_low"]), full2d(fp["u_high"]),
            full2d(fp["W1"]), full2d(fp["b1"]), full2d(fp["gamma"]), full2d(fp["beta"]),
            full2d(fp["W2"]), full2d(fp["b2"]), full2d(fp["q_all"]),
        ],
        out_specs=pl.BlockSpec((None, B, OUT_PACK), lambda t: (t, 0, 0)),
        scratch_shapes=[pltpu.VMEM((B, Z_DIM), jnp.float32)],    # z carried across steps
        compiler_params=pltpu.CompilerParams(dimension_semantics=("arbitrary",)),
    )(z0, u_seq, x_seq, eps_seq, fp["u_low"], fp["u_high"],
      fp["W1"], fp["b1"], fp["gamma"], fp["beta"], fp["W2"], fp["b2"], fp["q_all"])

    z_pred = out[:, :, :Z_DIM]
    w_mu = out[:, :, Z_DIM:Z_DIM + W_DIM]
    w_sig = out[:, :, Z_DIM + W_DIM:Z_DIM + 2 * W_DIM]
    return z_pred, w_mu, w_sig


def bayes_filter_forward(z, u, x, eps, fp):
    """Single step, matching BayesFilter.forward semantics (rollout with T=1)."""
    z_pred, w_mu, w_sig = bayes_filter_rollout(z, u[None], x[None], eps[None], fp)
    return z_pred[0], w_mu[0], w_sig[0]


# --------------------------- parameters & reference ---------------------------

def init_raw_params(key):
    ks = jax.random.split(key, 9)

    def linear(k, fan_in, fan_out):
        bound = 1.0 / (fan_in ** 0.5)
        kw, kb = jax.random.split(k)
        W = jax.random.uniform(kw, (fan_in, fan_out), jnp.float32, -bound, bound)
        b = jax.random.uniform(kb, (1, fan_out), jnp.float32, -bound, bound)
        return W, b

    p = {}
    p["u_low"] = -jnp.ones((1, U_DIM), jnp.float32)
    p["u_high"] = jnp.ones((1, U_DIM), jnp.float32)

    # f_psi: Linear(z+u, H) -> Sigmoid -> BN(H) -> Linear(H, M)   (input order [z|u])
    p["fW1"], p["fb1"] = linear(ks[0], Z_DIM + U_DIM, H_DIM)
    p["fg"] = jnp.ones((1, H_DIM), jnp.float32)
    p["fbeta"] = jnp.zeros((1, H_DIM), jnp.float32)
    p["fW2"], p["fb2"] = linear(ks[1], H_DIM, M)

    # q_chi_mu / q_chi_sigma: Linear(z+x+u, H) -> Sigmoid -> BN -> Linear(H, w) [+Softplus]
    p["mW1"], p["mb1"] = linear(ks[2], IN_DIM, H_DIM)
    p["mg"] = jnp.ones((1, H_DIM), jnp.float32)
    p["mbeta"] = jnp.zeros((1, H_DIM), jnp.float32)
    p["mW2"], p["mb2"] = linear(ks[3], H_DIM, W_DIM)

    p["sW1"], p["sb1"] = linear(ks[4], IN_DIM, H_DIM)
    p["sg"] = jnp.ones((1, H_DIM), jnp.float32)
    p["sbeta"] = jnp.zeros((1, H_DIM), jnp.float32)
    p["sW2"], p["sb2"] = linear(ks[5], H_DIM, W_DIM)

    # transition matrices (module uses randn*1e-4; std=0.1 so the check is meaningful)
    p["qA"] = 0.1 * jax.random.normal(ks[6], (M, Z_DIM, Z_DIM), jnp.float32)
    p["qB"] = 0.1 * jax.random.normal(ks[7], (M, Z_DIM, U_DIM), jnp.float32)
    p["qC"] = 0.1 * jax.random.normal(ks[8], (M, Z_DIM, W_DIM), jnp.float32)
    return p


def fuse_params(p):
    """Host-side fusion of the three MLPs + transition matrices for the kernel."""
    # first layer: fused input is [z | x | u]; f_psi ignores x -> zero block.
    W1 = jnp.zeros((IN_DIM, H3), jnp.float32)
    W1 = W1.at[:Z_DIM, :H_DIM].set(p["fW1"][:Z_DIM])
    W1 = W1.at[Z_DIM + X_DIM:, :H_DIM].set(p["fW1"][Z_DIM:])
    W1 = W1.at[:, H_DIM:2 * H_DIM].set(p["mW1"])
    W1 = W1.at[:, 2 * H_DIM:].set(p["sW1"])
    b1 = jnp.concatenate([p["fb1"], p["mb1"], p["sb1"]], axis=1)
    gamma = jnp.concatenate([p["fg"], p["mg"], p["sg"]], axis=1)
    beta = jnp.concatenate([p["fbeta"], p["mbeta"], p["sbeta"]], axis=1)

    # second layer: block-diagonal (384, 28) -> [logits(16) | w_mu(6) | w_sig(6)]
    W2 = jnp.zeros((H3, HEAD), jnp.float32)
    W2 = W2.at[:H_DIM, :M].set(p["fW2"])
    W2 = W2.at[H_DIM:2 * H_DIM, M:M + W_DIM].set(p["mW2"])
    W2 = W2.at[2 * H_DIM:, M + W_DIM:].set(p["sW2"])
    b2 = jnp.concatenate([p["fb2"], p["mb2"], p["sb2"]], axis=1)

    # row-interleaved transition matrices: q_all[m, i*11:(i+1)*11] = [A[m,i]|B[m,i]|C[m,i]]
    q_all = jnp.concatenate([p["qA"], p["qB"], p["qC"]], axis=-1).reshape(M, QCOLS)

    return {"u_low": p["u_low"], "u_high": p["u_high"],
            "W1": W1, "b1": b1, "gamma": gamma, "beta": beta,
            "W2": W2, "b2": b2, "q_all": q_all}


def _bn_train(h, gamma, beta):
    mean = jnp.mean(h, axis=0, keepdims=True)
    var = jnp.mean((h - mean) ** 2, axis=0, keepdims=True)
    return (h - mean) * lax.rsqrt(var + BN_EPS) * gamma + beta


def reference_forward(z, u, x, eps, p):
    dot = functools.partial(jnp.dot, precision=lax.Precision.HIGHEST)
    u = jnp.maximum(jnp.minimum(u, p["u_high"]), p["u_low"])

    zu = jnp.concatenate([z, u], axis=1)
    h = _bn_train(jax.nn.sigmoid(dot(zu, p["fW1"]) + p["fb1"]), p["fg"], p["fbeta"])
    alpha = jax.nn.softmax(dot(h, p["fW2"]) + p["fb2"], axis=-1)

    zxu = jnp.concatenate([z, x, u], axis=1)
    hm = _bn_train(jax.nn.sigmoid(dot(zxu, p["mW1"]) + p["mb1"]), p["mg"], p["mbeta"])
    w_mu = dot(hm, p["mW2"]) + p["mb2"]
    hs = _bn_train(jax.nn.sigmoid(dot(zxu, p["sW1"]) + p["sb1"]), p["sg"], p["sbeta"])
    w_sig = jax.nn.softplus(dot(hs, p["sW2"]) + p["sb2"])

    w = w_mu + w_sig * eps
    A = jnp.einsum("bm,mij->bij", alpha, p["qA"])
    Bm = jnp.einsum("bm,mij->bij", alpha, p["qB"])
    C = jnp.einsum("bm,mij->bij", alpha, p["qC"])
    z_next = (jnp.einsum("bij,bj->bi", A, z)
              + jnp.einsum("bij,bj->bi", Bm, u)
              + jnp.einsum("bij,bj->bi", C, w))
    return z_next, w_mu, w_sig


if __name__ == "__main__":
    B, T = 8, 8
    key = jax.random.PRNGKey(0)
    kp, kz, ku, kx, ke = jax.random.split(key, 5)
    raw = init_raw_params(kp)
    fused = fuse_params(raw)

    z0 = jax.random.normal(kz, (B, Z_DIM), jnp.float32)
    u_seq = 2.0 * jax.random.normal(ku, (T, B, U_DIM), jnp.float32)   # exercises the clamp
    x_seq = jax.random.normal(kx, (T, B, X_DIM), jnp.float32)
    # TODO(synk): Normal.rsample's noise has no in-kernel equivalent; eps is drawn with
    # jax.random outside the kernel and passed in (w = mu + sigma * eps).
    eps_seq = jax.random.normal(ke, (T, B, W_DIM), jnp.float32)

    # --- single step (BayesFilter.forward semantics) ---
    z1, wmu1, wsig1 = jax.block_until_ready(
        bayes_filter_forward(z0, u_seq[0], x_seq[0], eps_seq[0], fused))
    rz1, rmu1, rsig1 = reference_forward(z0, u_seq[0], x_seq[0], eps_seq[0], raw)
    assert jnp.allclose(z1, rz1, atol=2e-3, rtol=2e-3), "single-step z_next mismatch"
    assert jnp.allclose(wmu1, rmu1, atol=2e-3, rtol=2e-3), "single-step w_mu mismatch"
    assert jnp.allclose(wsig1, rsig1, atol=2e-3, rtol=2e-3), "single-step w_sigma mismatch"

    # --- T-step rollout in one launch (weights resident, z carried in VMEM) ---
    z_pred, w_mu, w_sig = jax.block_until_ready(
        bayes_filter_rollout(z0, u_seq, x_seq, eps_seq, fused))

    z_prev = z0
    for t in range(T):
        rz, rmu, rsig = reference_forward(z_prev, u_seq[t], x_seq[t], eps_seq[t], raw)
        assert jnp.allclose(z_pred[t], rz, atol=2e-3, rtol=2e-3), f"rollout z mismatch @t={t}"
        assert jnp.allclose(w_mu[t], rmu, atol=2e-3, rtol=2e-3), f"rollout w_mu mismatch @t={t}"
        assert jnp.allclose(w_sig[t], rsig, atol=2e-3, rtol=2e-3), f"rollout w_sig mismatch @t={t}"
        z_prev = z_pred[t]

    print("KERNEL_OK")
</pallas_src>

<mosaic_0001>
module attributes {stable_mosaic.version = 11 : i64} {
  func.func @bayes_filter_kernel(%arg0: i32, %arg1: memref<8x3xf32, #tpu.memory_space<vmem>>, %arg2: memref<1x8x2xf32, #tpu.memory_space<vmem>>, %arg3: memref<1x8x4xf32, #tpu.memory_space<vmem>>, %arg4: memref<1x8x6xf32, #tpu.memory_space<vmem>>, %arg5: memref<1x2xf32, #tpu.memory_space<vmem>>, %arg6: memref<1x2xf32, #tpu.memory_space<vmem>>, %arg7: memref<9x384xf32, #tpu.memory_space<vmem>>, %arg8: memref<1x384xf32, #tpu.memory_space<vmem>>, %arg9: memref<1x384xf32, #tpu.memory_space<vmem>>, %arg10: memref<1x384xf32, #tpu.memory_space<vmem>>, %arg11: memref<384x28xf32, #tpu.memory_space<vmem>>, %arg12: memref<1x28xf32, #tpu.memory_space<vmem>>, %arg13: memref<16x33xf32, #tpu.memory_space<vmem>>, %arg14: memref<1x8x16xf32, #tpu.memory_space<vmem>>, %arg15: memref<8x3xf32, #tpu.memory_space<vmem>>) attributes {dimension_semantics = [#tpu.dimension_semantics<arbitrary>], iteration_bounds = array<i64: 1>, scalar_prefetch = 0 : i64, scratch_operands = 1 : i64, tpu.core_type = #tpu.core_type<tc>, window_params = [{pipeline_mode = #tpu.pipeline_mode<synchronous>, transform_indices = @transform_0, window_bounds = array<i64: 8, 3>}, {transform_indices = @transform_1, window_bounds = array<i64: 1, 8, 2>}, {transform_indices = @transform_2, window_bounds = array<i64: 1, 8, 4>}, {transform_indices = @transform_3, window_bounds = array<i64: 1, 8, 6>}, {pipeline_mode = #tpu.pipeline_mode<synchronous>, transform_indices = @transform_4, window_bounds = array<i64: 1, 2>}, {pipeline_mode = #tpu.pipeline_mode<synchronous>, transform_indices = @transform_5, window_bounds = array<i64: 1, 2>}, {pipeline_mode = #tpu.pipeline_mode<synchronous>, transform_indices = @transform_6, window_bounds = array<i64: 9, 384>}, {pipeline_mode = #tpu.pipeline_mode<synchronous>, transform_indices = @transform_7, window_bounds = array<i64: 1, 384>}, {pipeline_mode = #tpu.pipeline_mode<synchronous>, transform_indices = @transform_8, window_bounds = array<i64: 1, 384>}, {pipeline_mode = #tpu.pipeline_mode<synchronous>, transform_indices = @transform_9, window_bounds = array<i64: 1, 384>}, {pipeline_mode = #tpu.pipeline_mode<synchronous>, transform_indices = @transform_10, window_bounds = array<i64: 384, 28>}, {pipeline_mode = #tpu.pipeline_mode<synchronous>, transform_indices = @transform_11, window_bounds = array<i64: 1, 28>}, {pipeline_mode = #tpu.pipeline_mode<synchronous>, transform_indices = @transform_12, window_bounds = array<i64: 16, 33>}, {transform_indices = @transform_13, window_bounds = array<i64: 1, 8, 16>}]} {
    %c0_i32 = arith.constant 0 : i32
    %0 = arith.cmpi eq, %arg0, %c0_i32 : i32
    %1 = arith.extui %0 : i1 to i32
    %c0_i32_0 = arith.constant 0 : i32
    %2 = arith.cmpi ne, %1, %c0_i32_0 : i32
    scf.if %2 {
      %c0_50 = arith.constant 0 : index
      %c0_51 = arith.constant 0 : index
      %106 = vector.load %arg1[%c0_50, %c0_51] : memref<8x3xf32, #tpu.memory_space<vmem>>, vector<8x3xf32>
      %c0_52 = arith.constant 0 : index
      %c0_53 = arith.constant 0 : index
      %107 = vector.load %arg15[%c0_52, %c0_53] : memref<8x3xf32, #tpu.memory_space<vmem>>, vector<8x3xf32>
      tpu.vector_store %arg15[%c0_52, %c0_53], %106 {strides = array<i32>} : memref<8x3xf32, #tpu.memory_space<vmem>>, vector<8x3xf32>,
    } else {
    }
    %c0 = arith.constant 0 : index
    %c0_1 = arith.constant 0 : index
    %3 = vector.load %arg15[%c0, %c0_1] : memref<8x3xf32, #tpu.memory_space<vmem>>, vector<8x3xf32>
    %c0_2 = arith.constant 0 : index
    %c0_3 = arith.constant 0 : index
    %c0_4 = arith.constant 0 : index
    %4 = vector.load %arg3[%c0_2, %c0_3, %c0_4] : memref<1x8x4xf32, #tpu.memory_space<vmem>>, vector<1x8x4xf32>
    %5 = vector.shape_cast %4 : vector<1x8x4xf32> to vector<8x4xf32>
    %c0_5 = arith.constant 0 : index
    %c0_6 = arith.constant 0 : index
    %c0_7 = arith.constant 0 : index
    %6 = vector.load %arg4[%c0_5, %c0_6, %c0_7] : memref<1x8x6xf32, #tpu.memory_space<vmem>>, vector<1x8x6xf32>
    %7 = vector.shape_cast %6 : vector<1x8x6xf32> to vector<8x6xf32>
    %c0_8 = arith.constant 0 : index
    %c0_9 = arith.constant 0 : index
    %c0_10 = arith.constant 0 : index
    %8 = vector.load %arg2[%c0_8, %c0_9, %c0_10] : memref<1x8x2xf32, #tpu.memory_space<vmem>>, vector<1x8x2xf32>
    %9 = vector.shape_cast %8 : vector<1x8x2xf32> to vector<8x2xf32>
    %c0_11 = arith.constant 0 : index
    %c0_12 = arith.constant 0 : index
    %10 = vector.load %arg6[%c0_11, %c0_12] : memref<1x2xf32, #tpu.memory_space<vmem>>, vector<1x2xf32>
    %11 = vector.broadcast %10 : vector<1x2xf32> to vector<8x2xf32>
    %12 = arith.minimumf %9, %11 : vector<8x2xf32>
    %c0_13 = arith.constant 0 : index
    %c0_14 = arith.constant 0 : index
    %13 = vector.load %arg5[%c0_13, %c0_14] : memref<1x2xf32, #tpu.memory_space<vmem>>, vector<1x2xf32>
    %14 = vector.broadcast %13 : vector<1x2xf32> to vector<8x2xf32>
    %15 = arith.maximumf %12, %14 : vector<8x2xf32>
    %16 = tpu.concatenate %3, %5, %15 in 1 : vector<8x3xf32>, vector<8x4xf32>, vector<8x2xf32> -> vector<8x9xf32>
    %c0_15 = arith.constant 0 : index
    %c0_16 = arith.constant 0 : index
    %17 = vector.load %arg7[%c0_15, %c0_16] : memref<9x384xf32, #tpu.memory_space<vmem>>, vector<9x384xf32>
    %cst = arith.constant dense<0.000000e+00> : vector<8x384xf32>
    %18 = tpu.matmul %16, %17, %cst {dimension_numbers = #tpu.dot_dimension_numbers<[1], [0], [0], [1], [0, 0, 1, 1], [], []>} : vector<8x9xf32>, vector<9x384xf32>, vector<8x384xf32> -> vector<8x384xf32>
    %c0_17 = arith.constant 0 : index
    %c0_18 = arith.constant 0 : index
    %19 = vector.load %arg8[%c0_17, %c0_18] : memref<1x384xf32, #tpu.memory_space<vmem>>, vector<1x384xf32>
    %20 = vector.broadcast %19 : vector<1x384xf32> to vector<8x384xf32>
    %21 = arith.addf %18, %20 : vector<8x384xf32>
    %22 = arith.negf %21 : vector<8x384xf32>
    %23 = math.exp %22 : vector<8x384xf32>
    %cst_19 = arith.constant 1.000000e+00 : f32
    %24 = vector.broadcast %cst_19 : f32 to vector<8x384xf32>
    %25 = arith.addf %24, %23 : vector<8x384xf32>
    %26 = arith.divf %24, %25 : vector<8x384xf32>
    %cst_20 = arith.constant dense<0.000000e+00> : vector<384xf32>
    %27 = vector.multi_reduction <add>, %26, %cst_20 [0] : vector<8x384xf32> to vector<384xf32>
    %28 = vector.shape_cast %27 : vector<384xf32> to vector<1x384xf32>
    %cst_21 = arith.constant 8.000000e+00 : f32
    %29 = vector.broadcast %cst_21 : f32 to vector<1x384xf32>
    %30 = arith.divf %28, %29 : vector<1x384xf32>
    %31 = arith.mulf %26, %26 : vector<8x384xf32>
    %cst_22 = arith.constant dense<0.000000e+00> : vector<384xf32>
    %32 = vector.multi_reduction <add>, %31, %cst_22 [0] : vector<8x384xf32> to vector<384xf32>
    %33 = vector.shape_cast %32 : vector<384xf32> to vector<1x384xf32>
    %cst_23 = arith.constant 8.000000e+00 : f32
    %34 = vector.broadcast %cst_23 : f32 to vector<1x384xf32>
    %35 = arith.divf %33, %34 : vector<1x384xf32>
    %36 = arith.mulf %30, %30 : vector<1x384xf32>
    %37 = arith.subf %35, %36 : vector<1x384xf32>
    %38 = vector.broadcast %30 : vector<1x384xf32> to vector<8x384xf32>
    %39 = arith.subf %26, %38 : vector<8x384xf32>
    %cst_24 = arith.constant 9.99999974E-6 : f32
    %40 = vector.broadcast %cst_24 : f32 to vector<1x384xf32>
    %41 = arith.addf %37, %40 : vector<1x384xf32>
    %42 = math.rsqrt %41 : vector<1x384xf32>
    %43 = vector.broadcast %42 : vector<1x384xf32> to vector<8x384xf32>
    %44 = arith.mulf %39, %43 : vector<8x384xf32>
    %c0_25 = arith.constant 0 : index
    %c0_26 = arith.constant 0 : index
    %45 = vector.load %arg9[%c0_25, %c0_26] : memref<1x384xf32, #tpu.memory_space<vmem>>, vector<1x384xf32>
    %46 = vector.broadcast %45 : vector<1x384xf32> to vector<8x384xf32>
    %47 = arith.mulf %44, %46 : vector<8x384xf32>
    %c0_27 = arith.constant 0 : index
    %c0_28 = arith.constant 0 : index
    %48 = vector.load %arg10[%c0_27, %c0_28] : memref<1x384xf32, #tpu.memory_space<vmem>>, vector<1x384xf32>
    %49 = vector.broadcast %48 : vector<1x384xf32> to vector<8x384xf32>
    %50 = arith.addf %47, %49 : vector<8x384xf32>
    %c0_29 = arith.constant 0 : index
    %c0_30 = arith.constant 0 : index
    %51 = vector.load %arg11[%c0_29, %c0_30] : memref<384x28xf32, #tpu.memory_space<vmem>>, vector<384x28xf32>
    %cst_31 = arith.constant dense<0.000000e+00> : vector<8x28xf32>
    %52 = tpu.matmul %50, %51, %cst_31 {dimension_numbers = #tpu.dot_dimension_numbers<[1], [0], [0], [1], [0, 0, 1, 1], [], []>} : vector<8x384xf32>, vector<384x28xf32>, vector<8x28xf32> -> vector<8x28xf32>
    %c0_32 = arith.constant 0 : index
    %c0_33 = arith.constant 0 : index
    %53 = vector.load %arg12[%c0_32, %c0_33] : memref<1x28xf32, #tpu.memory_space<vmem>>, vector<1x28xf32>
    %54 = vector.broadcast %53 : vector<1x28xf32> to vector<8x28xf32>
    %55 = arith.addf %52, %54 : vector<8x28xf32>
    %56 = vector.extract_strided_slice %55 {offsets = [0, 0], sizes = [8, 16], strides = [1, 1]} : vector<8x28xf32> to vector<8x16xf32>
    %cst_34 = arith.constant dense<0xFF800000> : vector<8xf32>
    %57 = vector.multi_reduction <maximumf>, %56, %cst_34 [1] : vector<8x16xf32> to vector<8xf32>
    %58 = vector.shape_cast %57 : vector<8xf32> to vector<8x1xf32>
    %59 = vector.broadcast %58 : vector<8x1xf32> to vector<8x16xf32>
    %60 = arith.subf %56, %59 : vector<8x16xf32>
    %61 = math.exp %60 : vector<8x16xf32>
    %cst_35 = arith.constant dense<0.000000e+00> : vector<8xf32>
    %62 = vector.multi_reduction <add>, %61, %cst_35 [1] : vector<8x16xf32> to vector<8xf32>
    %63 = vector.shape_cast %62 : vector<8xf32> to vector<8x1xf32>
    %64 = tpu.reciprocal %63 {approx = true} : vector<8x1xf32> -> vector<8x1xf32>
    %65 = vector.broadcast %64 : vector<8x1xf32> to vector<8x16xf32>
    %66 = arith.mulf %61, %65 : vector<8x16xf32>
    %67 = vector.extract_strided_slice %55 {offsets = [0, 16], sizes = [8, 6], strides = [1, 1]} : vector<8x28xf32> to vector<8x6xf32>
    %68 = vector.extract_strided_slice %55 {offsets = [0, 22], sizes = [8, 6], strides = [1, 1]} : vector<8x28xf32> to vector<8x6xf32>
    %cst_36 = arith.constant 0.000000e+00 : f32
    %69 = vector.broadcast %cst_36 : f32 to vector<8x6xf32>
    %70 = arith.maximumf %68, %69 : vector<8x6xf32>
    %71 = vector.broadcast %cst_36 : f32 to vector<8x6xf32>
    %72 = arith.subf %68, %71 : vector<8x6xf32>
    %73 = arith.cmpf one, %72, %72 : vector<8x6xf32>
    %74 = vector.broadcast %cst_36 : f32 to vector<8x6xf32>
    %75 = arith.addf %68, %74 : vector<8x6xf32>
    %76 = math.absf %72 : vector<8x6xf32>
    %cst_37 = arith.constant 0.000000e+00 : f32
    %77 = vector.broadcast %cst_37 : f32 to vector<8x6xf32>
    %78 = arith.subf %77, %76 : vector<8x6xf32>
    %79 = math.exp %78 : vector<8x6xf32>
    %80 = math.log1p %79 : vector<8x6xf32>
    %81 = arith.addf %70, %80 : vector<8x6xf32>
    %82 = arith.select %73, %75, %81 : vector<8x6xi1>, vector<8x6xf32>
    %83 = arith.mulf %82, %7 : vector<8x6xf32>
    %84 = arith.addf %67, %83 : vector<8x6xf32>
    %85 = tpu.concatenate %3, %15, %84 in 1 : vector<8x3xf32>, vector<8x2xf32>, vector<8x6xf32> -> vector<8x11xf32>
    %c0_38 = arith.constant 0 : index
    %c0_39 = arith.constant 0 : index
    %86 = vector.load %arg13[%c0_38, %c0_39] : memref<16x33xf32, #tpu.memory_space<vmem>>, vector<16x33xf32>
    %cst_40 = arith.constant dense<0.000000e+00> : vector<8x33xf32>
    %87 = tpu.matmul %66, %86, %cst_40 {dimension_numbers = #tpu.dot_dimension_numbers<[1], [0], [0], [1], [0, 0, 1, 1], [], []>} : vector<8x16xf32>, vector<16x33xf32>, vector<8x33xf32> -> vector<8x33xf32>
    %88 = tpu.concatenate %85, %85, %85 in 1 : vector<8x11xf32>, vector<8x11xf32>, vector<8x11xf32> -> vector<8x33xf32>
    %89 = arith.mulf %87, %88 : vector<8x33xf32>
    %90 = vector.extract_strided_slice %89 {offsets = [0, 0], sizes = [8, 11], strides = [1, 1]} : vector<8x33xf32> to vector<8x11xf32>
    %cst_41 = arith.constant dense<0.000000e+00> : vector<8xf32>
    %91 = vector.multi_reduction <add>, %90, %cst_41 [1] : vector<8x11xf32> to vector<8xf32>
    %92 = vector.shape_cast %91 : vector<8xf32> to vector<8x1xf32>
    %93 = vector.extract_strided_slice %89 {offsets = [0, 11], sizes = [8, 11], strides = [1, 1]} : vector<8x33xf32> to vector<8x11xf32>
    %cst_42 = arith.constant dense<0.000000e+00> : vector<8xf32>
    %94 = vector.multi_reduction <add>, %93, %cst_42 [1] : vector<8x11xf32> to vector<8xf32>
    %95 = vector.shape_cast %94 : vector<8xf32> to vector<8x1xf32>
    %96 = vector.extract_strided_slice %89 {offsets = [0, 22], sizes = [8, 11], strides = [1, 1]} : vector<8x33xf32> to vector<8x11xf32>
    %cst_43 = arith.constant dense<0.000000e+00> : vector<8xf32>
    %97 = vector.multi_reduction <add>, %96, %cst_43 [1] : vector<8x11xf32> to vector<8xf32>
    %98 = vector.shape_cast %97 : vector<8xf32> to vector<8x1xf32>
    %99 = tpu.concatenate %92, %95, %98 in 1 : vector<8x1xf32>, vector<8x1xf32>, vector<8x1xf32> -> vector<8x3xf32>
    %c0_44 = arith.constant 0 : index
    %c0_45 = arith.constant 0 : index
    %100 = vector.load %arg15[%c0_44, %c0_45] : memref<8x3xf32, #tpu.memory_space<vmem>>, vector<8x3xf32>
    tpu.vector_store %arg15[%c0_44, %c0_45], %99 {strides = array<i32>} : memref<8x3xf32, #tpu.memory_space<vmem>>, vector<8x3xf32>,
    %cst_46 = arith.constant 0.000000e+00 : f32
    %101 = vector.broadcast %cst_46 : f32 to vector<8x1xf32>
    %102 = tpu.concatenate %99, %67, %82, %101 in 1 : vector<8x3xf32>, vector<8x6xf32>, vector<8x6xf32>, vector<8x1xf32> -> vector<8x16xf32>
    %c0_47 = arith.constant 0 : index
    %c0_48 = arith.constant 0 : index
    %c0_49 = arith.constant 0 : index
    %103 = vector.load %arg14[%c0_47, %c0_48, %c0_49] : memref<1x8x16xf32, #tpu.memory_space<vmem>>, vector<1x8x16xf32>
    %104 = vector.shape_cast %103 : vector<1x8x16xf32> to vector<8x16xf32>
    %105 = vector.shape_cast %102 : vector<8x16xf32> to vector<1x8x16xf32>
    tpu.vector_store %arg14[%c0_47, %c0_48, %c0_49], %105 {strides = array<i32>} : memref<1x8x16xf32, #tpu.memory_space<vmem>>, vector<1x8x16xf32>,
    return
  }
  func.func @transform_0(%arg0: i32) -> (i32, i32) {
    %c0_i32 = arith.constant 0 : i32
    %c0_i32_0 = arith.constant 0 : i32
    %c0_i32_1 = arith.constant 0 : i32
    return %c0_i32, %c0_i32_0 : i32, i32
  }
  func.func @transform_1(%arg0: i32) -> (i32, i32, i32) {
    %c0_i32 = arith.constant 0 : i32
    %c0_i32_0 = arith.constant 0 : i32
    %c0_i32_1 = arith.constant 0 : i32
    return %arg0, %c0_i32, %c0_i32_0 : i32, i32, i32
  }
  func.func @transform_2(%arg0: i32) -> (i32, i32, i32) {
    %c0_i32 = arith.constant 0 : i32
    %c0_i32_0 = arith.constant 0 : i32
    %c0_i32_1 = arith.constant 0 : i32
    return %arg0, %c0_i32, %c0_i32_0 : i32, i32, i32
  }
  func.func @transform_3(%arg0: i32) -> (i32, i32, i32) {
    %c0_i32 = arith.constant 0 : i32
    %c0_i32_0 = arith.constant 0 : i32
    %c0_i32_1 = arith.constant 0 : i32
    return %arg0, %c0_i32, %c0_i32_0 : i32, i32, i32
  }
  func.func @transform_4(%arg0: i32) -> (i32, i32) {
    %c0_i32 = arith.constant 0 : i32
    %c0_i32_0 = arith.constant 0 : i32
    %c0_i32_1 = arith.constant 0 : i32
    return %c0_i32, %c0_i32_0 : i32, i32
  }
  func.func @transform_5(%arg0: i32) -> (i32, i32) {
    %c0_i32 = arith.constant 0 : i32
    %c0_i32_0 = arith.constant 0 : i32
    %c0_i32_1 = arith.constant 0 : i32
    return %c0_i32, %c0_i32_0 : i32, i32
  }
  func.func @transform_6(%arg0: i32) -> (i32, i32) {
    %c0_i32 = arith.constant 0 : i32
    %c0_i32_0 = arith.constant 0 : i32
    %c0_i32_1 = arith.constant 0 : i32
    return %c0_i32, %c0_i32_0 : i32, i32
  }
  func.func @transform_7(%arg0: i32) -> (i32, i32) {
    %c0_i32 = arith.constant 0 : i32
    %c0_i32_0 = arith.constant 0 : i32
    %c0_i32_1 = arith.constant 0 : i32
    return %c0_i32, %c0_i32_0 : i32, i32
  }
  func.func @transform_8(%arg0: i32) -> (i32, i32) {
    %c0_i32 = arith.constant 0 : i32
    %c0_i32_0 = arith.constant 0 : i32
    %c0_i32_1 = arith.constant 0 : i32
    return %c0_i32, %c0_i32_0 : i32, i32
  }
  func.func @transform_9(%arg0: i32) -> (i32, i32) {
    %c0_i32 = arith.constant 0 : i32
    %c0_i32_0 = arith.constant 0 : i32
    %c0_i32_1 = arith.constant 0 : i32
    return %c0_i32, %c0_i32_0 : i32, i32
  }
  func.func @transform_10(%arg0: i32) -> (i32, i32) {
    %c0_i32 = arith.constant 0 : i32
    %c0_i32_0 = arith.constant 0 : i32
    %c0_i32_1 = arith.constant 0 : i32
    return %c0_i32, %c0_i32_0 : i32, i32
  }
  func.func @transform_11(%arg0: i32) -> (i32, i32) {
    %c0_i32 = arith.constant 0 : i32
    %c0_i32_0 = arith.constant 0 : i32
    %c0_i32_1 = arith.constant 0 : i32
    return %c0_i32, %c0_i32_0 : i32, i32
  }
  func.func @transform_12(%arg0: i32) -> (i32, i32) {
    %c0_i32 = arith.constant 0 : i32
    %c0_i32_0 = arith.constant 0 : i32
    %c0_i32_1 = arith.constant 0 : i32
    return %c0_i32, %c0_i32_0 : i32, i32
  }
  func.func @transform_13(%arg0: i32) -> (i32, i32, i32) {
    %c0_i32 = arith.constant 0 : i32
    %c0_i32_0 = arith.constant 0 : i32
    %c0_i32_1 = arith.constant 0 : i32
    return %arg0, %c0_i32, %c0_i32_0 : i32, i32, i32
  }
}

</mosaic_0001>

<llo_original>
// kernel: tpu_custom_call.1
$region0: #{tpu_custom_call.1}
  #allocation0 [shape = 'u32[]', space=smem, size = 0x4, offset = 0x4, fixed_abs, tag = 'smem constant byte address 0x4 - core index']
  #allocation1 [shape = 'u32[144,128]{1,0:T(1,128)}', space=vmem, size = 0x12000, scoped, tag = 'internal scratch']
  #allocation2 [shape = 'f32[8,3]{1,0:T(8,128)}', space=vmem, size = 0x1000, scoped, tag = 'scratch operand']
  %s0 = inlined_call_operand.vmem [shape: f32[8,3], index: 0, kind: input, shape index: {}]
  %s1 = inlined_call_operand.vmem [shape: f32[1,8,2], index: 1, kind: input, shape index: {}]
  %s2 = inlined_call_operand.vmem [shape: f32[1,8,4], index: 2, kind: input, shape index: {}]
  %s3 = inlined_call_operand.vmem [shape: f32[1,8,6], index: 3, kind: input, shape index: {}]
  %s4 = inlined_call_operand.vmem [shape: f32[1,2], index: 4, kind: input, shape index: {}]
  %s5 = inlined_call_operand.vmem [shape: f32[1,2], index: 5, kind: input, shape index: {}]
  %s6 = inlined_call_operand.vmem [shape: f32[9,384], index: 6, kind: input, shape index: {}]
  %s7 = inlined_call_operand.vmem [shape: f32[1,384], index: 7, kind: input, shape index: {}]
  %s8 = inlined_call_operand.vmem [shape: f32[1,384], index: 8, kind: input, shape index: {}]
  %s9 = inlined_call_operand.vmem [shape: f32[1,384], index: 9, kind: input, shape index: {}]
  %s10 = inlined_call_operand.vmem [shape: f32[384,28], index: 10, kind: input, shape index: {}]
  %s11 = inlined_call_operand.vmem [shape: f32[1,28], index: 11, kind: input, shape index: {}]
  %s12 = inlined_call_operand.vmem [shape: f32[16,33], index: 12, kind: input, shape index: {}]
  %s13 = inlined_call_operand.hbm [shape: f32[1,8,16], index: 13, kind: output, shape index: {}]
  %s14 = sld [smem:[#allocation0]]
  $region66: #{tpu_custom_call.1} parent=0
    _
  %s16 = ssub.s32 1, %s14
  %s17 = scalar_select 0, %s16, %s14
  $region1: #{tpu_custom_call.1} parent=0
    #allocation3 [shape = 'u8[4096]{0}', space=vmem, size = 0x1000, scoped, tag = 'output window, operand 0, single buffered']
    #allocation4 [shape = 's32[1]{0}', space=sflag, size = 0x4, scoped, tag = 'scoped memory for tpu_custom_call.1']
    %18 = vsyncpa [#allocation4], 0
    // Predicated region
    $region2: #{tpu_custom_call.1} parent=1 // pred_check
      _
    $region3: #{tpu_custom_call.1} parent=1 // pred_check_branch
      %20 = sbr.rel (0) target = $region5
    $region4: #{tpu_custom_call.1} parent=1 // pred_region
      _
    $region5: #{tpu_custom_call.1} parent=1 // pred_fallthru
      _
    // Predicated region
    $region6: #{tpu_custom_call.1} parent=1 // pred_check
      _
    $region7: #{tpu_custom_call.1} parent=1 // pred_check_branch
      %22 = sbr.rel (0) target = $region9
    $region8: #{tpu_custom_call.1} parent=1 // pred_region
      _
    $region9: #{tpu_custom_call.1} parent=1 // pred_fallthru
      _
    // Predicated region
    $region10: #{tpu_custom_call.1} parent=1 // pred_check
      _
    $region11: #{tpu_custom_call.1} parent=1 // pred_check_branch
      %24 = sbr.rel (0) target = $region13
    $region12: #{tpu_custom_call.1} parent=1 // pred_region
      _
    $region13: #{tpu_custom_call.1} parent=1 // pred_fallthru
      _
    // Predicated region
    $region14: #{tpu_custom_call.1} parent=1 // pred_check
      _
    $region15: #{tpu_custom_call.1} parent=1 // pred_check_branch
      %26 = sbr.rel (0) target = $region17
    $region16: #{tpu_custom_call.1} parent=1 // pred_region
      _
    $region17: #{tpu_custom_call.1} parent=1 // pred_fallthru
      _
    // Predicated region
    $region18: #{tpu_custom_call.1} parent=1 // pred_check
      _
    $region19: #{tpu_custom_call.1} parent=1 // pred_check_branch
      %28 = sbr.rel (0) target = $region21
    $region20: #{tpu_custom_call.1} parent=1 // pred_region
      _
    $region21: #{tpu_custom_call.1} parent=1 // pred_fallthru
      _
    // Predicated region
    $region22: #{tpu_custom_call.1} parent=1 // pred_check
      _
    $region23: #{tpu_custom_call.1} parent=1 // pred_check_branch
      %30 = sbr.rel (0) target = $region25
    $region24: #{tpu_custom_call.1} parent=1 // pred_region
      _
    $region25: #{tpu_custom_call.1} parent=1 // pred_fallthru
      _
    // Predicated region
    $region26: #{tpu_custom_call.1} parent=1 // pred_check
      _
    $region27: #{tpu_custom_call.1} parent=1 // pred_check_branch
      %32 = sbr.rel (0) target = $region29
    $region28: #{tpu_custom_call.1} parent=1 // pred_region
      _
    $region29: #{tpu_custom_call.1} parent=1 // pred_fallthru
      _
    // Predicated region
    $region30: #{tpu_custom_call.1} parent=1 // pred_check
      _
    $region31: #{tpu_custom_call.1} parent=1 // pred_check_branch
      %34 = sbr.rel (0) target = $region33
    $region32: #{tpu_custom_call.1} parent=1 // pred_region
      _
    $region33: #{tpu_custom_call.1} parent=1 // pred_fallthru
      _
    // Predicated region
    $region34: #{tpu_custom_call.1} parent=1 // pred_check
      _
    $region35: #{tpu_custom_call.1} parent=1 // pred_check_branch
      %36 = sbr.rel (0) target = $region37
    $region36: #{tpu_custom_call.1} parent=1 // pred_region
      _
    $region37: #{tpu_custom_call.1} parent=1 // pred_fallthru
      _
    // Predicated region
    $region38: #{tpu_custom_call.1} parent=1 // pred_check
      _
    $region39: #{tpu_custom_call.1} parent=1 // pred_check_branch
      %38 = sbr.rel (0) target = $region41
    $region40: #{tpu_custom_call.1} parent=1 // pred_region
      _
    $region41: #{tpu_custom_call.1} parent=1 // pred_fallthru
      _
    // Predicated region
    $region42: #{tpu_custom_call.1} parent=1 // pred_check
      _
    $region43: #{tpu_custom_call.1} parent=1 // pred_check_branch
      %40 = sbr.rel (0) target = $region45
    $region44: #{tpu_custom_call.1} parent=1 // pred_region
      _
    $region45: #{tpu_custom_call.1} parent=1 // pred_fallthru
      _
    // Predicated region
    $region46: #{tpu_custom_call.1} parent=1 // pred_check
      _
    $region47: #{tpu_custom_call.1} parent=1 // pred_check_branch
      %42 = sbr.rel (0) target = $region49
    $region48: #{tpu_custom_call.1} parent=1 // pred_region
      _
    $region49: #{tpu_custom_call.1} parent=1 // pred_fallthru
      _
    // Predicated region
    $region50: #{tpu_custom_call.1} parent=1 // pred_check
      _
    $region51: #{tpu_custom_call.1} parent=1 // pred_check_branch
      %44 = sbr.rel (0) target = $region53
    $region52: #{tpu_custom_call.1} parent=1 // pred_region
      _
    $region53: #{tpu_custom_call.1} parent=1 // pred_fallthru
      _
    %p45 = scmp.eq.s32.totalorder 0, 0
    // Predicated region
    $region54: #{tpu_custom_call.1} parent=1 // pred_check
      %p46 = pneg %p45
    $region55: #{tpu_custom_call.1} parent=1 // pred_check_branch
      %48 = sbr.rel (%p46) target = $region57
    $region56: #{tpu_custom_call.1} parent=1 // pred_region
      %v49 = vld [vmem:[%s0] sm:$0xff]
      %vm50 = vcmask 23552
      %51 = vst.msk [vmem:[#allocation2] sm:$0xff] %vm50, %v49
    $region57: #{tpu_custom_call.1} parent=1 // pred_fallthru
      _
    %v52 = vld [vmem:[#allocation2] sm:$0xff]
    %v53 = vld [vmem:[%s2] sm:$0xff]
    %v54 = vld [vmem:[%s3] sm:$0xff]
    %v55 = vld [vmem:[%s1] sm:$0xff]
    %v56 = vld [vmem:[%s5] sm:$0x1]
    %v58 = vlaneseq
    %v59 = vshrl.u32 %v58, 7
    %v60 = vsub.s32 0, %v59
    %v61 = vrot.slane %v56, %v60
    %v63 = vmin.f32 %v55, %v61
    %v64 = vld [vmem:[%s4] sm:$0x1]
    %v66 = vlaneseq
    %v67 = vshrl.u32 %v66, 7
    %v68 = vsub.s32 0, %v67
    %v69 = vrot.slane %v64, %v68
    %v71 = vmax.f32 %v63, %v69
    %73 = vrot.lane.b32.xlu0 %v53, 3
    %v74 = vpop.permute.xlu0 %73
    %77 = vrot.lane.b32.xlu0 %v71, 7
    %v78 = vpop.permute.xlu0 %77
    %vm80 = vcmask 23552
    %v81 = vsel %vm80, %v52, %v74
    %vm82 = vcmask 56320
    %v83 = vsel %vm82, %v81, %v78
    %v84 = vld [vmem:[%s6] sm:$0xff]
    %v85 = vld [vmem:[%s6 + $0x8] sm:$0xff]
    %v86 = vld [vmem:[%s6 + $0x10] sm:$0xff]
    %v87 = vld [vmem:[%s6 + $0x18] sm:$0x1]
    %v88 = vld [vmem:[%s6 + $0x20] sm:$0x1]
    %v89 = vld [vmem:[%s6 + $0x28] sm:$0x1]
    %v90 = vld [vmem:[%s7] sm:$0x7]
    %v92 = vlaneseq
    %v93 = vshrl.u32 %v92, 7
    %v94 = vsub.s32 0, %v93
    %v95 = vrot.slane %v90, %v94
    %v96 = vlaneseq
    %v97 = vshrl.u32 %v96, 7
    %v98 = vsub.s32 1, %v97
    %v99 = vrot.slane %v90, %v98
    %v100 = vlaneseq
    %v101 = vshrl.u32 %v100, 7
    %v102 = vsub.s32 2, %v101
    %v103 = vrot.slane %v90, %v102
    %vm107 = vcmask 72704
    %v109 = vsel %vm107, %v83, 0
    %vm111 = vcmask 1040384
    %v113 = vsel %vm111, %v87, 0
    %v116 = vsel %vm111, %v88, 0
    %v119 = vsel %vm111, %v89, 0
    %121 = vmatprep.subr.mxu0 0.0
    %122 = vmatpush1.msra.mxu0 0.0
    %123 = vmatprep.subr.mxu0 0.0
    %124 = vmatpush1.msra.mxu0 0.0
    %125 = vmatprep.subr.mxu0 0.0
    %126 = vmatpush1.msra.mxu0 0.0
    %127 = vmatprep.subr.mxu0 0.0
    %128 = vmatpush1.msra.mxu0 0.0
    %129 = vmatprep.subr.mxu0 0.0
    %130 = vmatpush1.msra.mxu0 0.0
    %131 = vmatprep.subr.mxu0 0.0
    %132 = vmatpush1.msra.mxu0 0.0
    %133 = vmatprep.subr.mxu0 0.0
    %134 = vmatpush1.msra.mxu0 0.0
    %135 = vmatprep.subr.mxu0 0.0
    %136 = vmatpush1.msra.mxu0 0.0
    %137 = vmatprep.subr.mxu0 0.0
    %138 = vmatpush1.msra.mxu0 0.0
    %139 = vmatprep.subr.mxu0 0.0
    %140 = vmatpush1.msra.mxu0 0.0
    %141 = vmatprep.subr.mxu0 0.0
    %142 = vmatpush1.msra.mxu0 0.0
    %143 = vmatprep.subr.mxu0 0.0
    %144 = vmatpush1.msra.mxu0 0.0
    %145 = vmatprep.subr.mxu0 0.0
    %146 = vmatpush1.msra.mxu0 0.0
    %147 = vmatprep.subr.mxu0 0.0
    %148 = vmatpush1.msra.mxu0 0.0
    %149 = vmatprep.subr.mxu0 %v116
    %150 = vmatpush1.msra.mxu0 %v113
    %151 = vmatprep.subr.mxu0 %v85
    %152 = vmatpush1.msra.mxu0 %v84
    %153 = vmatprep.subr.mxu0 0.0
    %154 = vmatpush2.msra.mxu0 0.0
    %155 = vmatprep.subr.mxu0 0.0
    %156 = vmatpush2.msra.mxu0 0.0
    %157 = vmatprep.subr.mxu0 0.0
    %158 = vmatpush2.msra.mxu0 0.0
    %159 = vmatprep.subr.mxu0 0.0
    %160 = vmatpush2.msra.mxu0 0.0
    %161 = vmatprep.subr.mxu0 0.0
    %162 = vmatpush2.msra.mxu0 0.0
    %163 = vmatprep.subr.mxu0 0.0
    %164 = vmatpush2.msra.mxu0 0.0
    %165 = vmatprep.subr.mxu0 0.0
    %166 = vmatpush2.msra.mxu0 0.0
    %167 = vmatprep.subr.mxu0 0.0
    %168 = vmatpush2.msra.mxu0 0.0
    %169 = vmatprep.subr.mxu0 0.0
    %170 = vmatpush2.msra.mxu0 0.0
    %171 = vmatprep.subr.mxu0 0.0
    %172 = vmatpush2.msra.mxu0 0.0
    %173 = vmatprep.subr.mxu0 0.0
    %174 = vmatpush2.msra.mxu0 0.0
    %175 = vmatprep.subr.mxu0 0.0
    %176 = vmatpush2.msra.mxu0 0.0
    %177 = vmatprep.subr.mxu0 0.0
    %178 = vmatpush2.msra.mxu0 0.0
    %179 = vmatprep.subr.mxu0 0.0
    %180 = vmatpush2.msra.mxu0 0.0
    %181 = vmatprep.subr.mxu0 0.0
    %182 = vmatpush2.msra.mxu0 0.0
    %183 = vmatprep.subr.mxu0 0.0
    %184 = vmatpush2.msra.mxu0 0.0
    %185 = vmatprep.mubr.f32.mxu0 0.0
    %186 = vmatmul.mubr.f32.gmra.mxu0 %v109
    %v187 = vpop.f32.mrf.mxu0
    %v188 = vadd.f32 %v95, %v187
    %v189 = vpop.f32.mrf.mxu0
    %v190 = vadd.f32 %v99, %v189
    %191 = vdwg.mxu0
    %192 = vmatprep.subr.mxu0 0.0
    %193 = vmatpush1.msra.mxu0 0.0
    %194 = vmatprep.subr.mxu0 0.0
    %195 = vmatpush1.msra.mxu0 0.0
    %196 = vmatprep.subr.mxu0 0.0
    %197 = vmatpush1.msra.mxu0 0.0
    %198 = vmatprep.subr.mxu0 0.0
    %199 = vmatpush1.msra.mxu0 0.0
    %200 = vmatprep.subr.mxu0 0.0
    %201 = vmatpush1.msra.mxu0 0.0
    %202 = vmatprep.subr.mxu0 0.0
    %203 = vmatpush1.msra.mxu0 0.0
    %204 = vmatprep.subr.mxu0 0.0
    %205 = vmatpush1.msra.mxu0 0.0
    %206 = vmatprep.subr.mxu0 0.0
    %207 = vmatpush1.msra.mxu0 0.0
    %208 = vmatprep.subr.mxu0 0.0
    %209 = vmatpush1.msra.mxu0 0.0
    %210 = vmatprep.subr.mxu0 0.0
    %211 = vmatpush1.msra.mxu0 0.0
    %212 = vmatprep.subr.mxu0 0.0
    %213 = vmatpush1.msra.mxu0 0.0
    %214 = vmatprep.subr.mxu0 0.0
    %215 = vmatpush1.msra.mxu0 0.0
    %216 = vmatprep.subr.mxu0 0.0
    %217 = vmatpush1.msra.mxu0 0.0
    %218 = vmatprep.subr.mxu0 0.0
    %219 = vmatpush1.msra.mxu0 0.0
    %220 = vmatprep.subr.mxu0 0.0
    %221 = vmatpush1.msra.mxu0 %v119
    %222 = vmatprep.subr.mxu0 0.0
    %223 = vmatpush1.msra.mxu0 %v86
    %224 = vmatprep.subr.mxu0 0.0
    %225 = vmatpush2.msra.mxu0 0.0
    %226 = vmatprep.subr.mxu0 0.0
    %227 = vmatpush2.msra.mxu0 0.0
    %228 = vmatprep.subr.mxu0 0.0
    %229 = vmatpush2.msra.mxu0 0.0
    %230 = vmatprep.subr.mxu0 0.0
    %231 = vmatpush2.msra.mxu0 0.0
    %232 = vmatprep.subr.mxu0 0.0
    %233 = vmatpush2.msra.mxu0 0.0
    %234 = vmatprep.subr.mxu0 0.0
    %235 = vmatpush2.msra.mxu0 0.0
    %236 = vmatprep.subr.mxu0 0.0
    %237 = vmatpush2.msra.mxu0 0.0
    %238 = vmatprep.subr.mxu0 0.0
    %239 = vmatpush2.msra.mxu0 0.0
    %240 = vmatprep.subr.mxu0 0.0
    %241 = vmatpush2.msra.mxu0 0.0
    %242 = vmatprep.subr.mxu0 0.0
    %243 = vmatpush2.msra.mxu0 0.0
    %244 = vmatprep.subr.mxu0 0.0
    %245 = vmatpush2.msra.mxu0 0.0
    %246 = vmatprep.subr.mxu0 0.0
    %247 = vmatpush2.msra.mxu0 0.0
    %248 = vmatprep.subr.mxu0 0.0
    %249 = vmatpush2.msra.mxu0 0.0
    %250 = vmatprep.subr.mxu0 0.0
    %251 = vmatpush2.msra.mxu0 0.0
    %252 = vmatprep.subr.mxu0 0.0
    %253 = vmatpush2.msra.mxu0 0.0
    %254 = vmatprep.subr.mxu0 0.0
    %255 = vmatpush2.msra.mxu0 0.0
    %256 = vmatprep.mubr.f32.mxu0 0.0
    %257 = vmatmul.mubr.f32.gmra.mxu0 %v109
    %v258 = vpop.f32.mrf.mxu0
    %v259 = vadd.f32 %v103, %v258
    %v260 = vpop.f32.mrf.mxu0
    %261 = vdwg.mxu0
    %v262 = vxor.u32 %v188, 2147483648
    %v263 = vxor.u32 %v190, 2147483648
    %v264 = vxor.u32 %v259, 2147483648
    %v265 = vmul.f32 %v262, 1.442695
    %v266 = vpow.pop %v265
    %v267 = vmul.f32 %v263, 1.442695
    %v268 = vpow.pop %v267
    %v269 = vmul.f32 %v264, 1.442695
    %v270 = vpow.pop %v269
    %v271 = vadd.f32 %v266, 1.0
    %v272 = vadd.f32 %v268, 1.0
    %v273 = vadd.f32 %v270, 1.0
    %v274 = vrcp.pop %v271
    %v275 = vmul.f32 1.0, %v274
    %v276 = vrcp.pop %v272
    %v277 = vmul.f32 1.0, %v276
    %v278 = vrcp.pop %v273
    %v279 = vmul.f32 1.0, %v278
    %v280 = vrot.slane %v275, 4
    %v281 = vadd.f32 %v275, %v280
    %v282 = vrot.slane %v281, 2
    %v283 = vadd.f32 %v281, %v282
    %v284 = vrot.slane %v283, 1
    %v285 = vadd.f32 %v283, %v284
    %v286 = vrot.slane %v277, 4
    %v287 = vadd.f32 %v277, %v286
    %v288 = vrot.slane %v287, 2
    %v289 = vadd.f32 %v287, %v288
    %v290 = vrot.slane %v289, 1
    %v291 = vadd.f32 %v289, %v290
    %v292 = vrot.slane %v279, 4
    %v293 = vadd.f32 %v279, %v292
    %v294 = vrot.slane %v293, 2
    %v295 = vadd.f32 %v293, %v294
    %v296 = vrot.slane %v295, 1
    %v297 = vadd.f32 %v295, %v296
    %v298 = vrcp.pop 8.0
    %v299 = vmul.f32 %v285, %v298
    %v300 = vmul.f32 %v291, %v298
    %v301 = vmul.f32 %v297, %v298
    %v302 = vmul.f32 %v275, %v275
    %v303 = vmul.f32 %v277, %v277
    %v304 = vmul.f32 %v279, %v279
    %v305 = vrot.slane %v302, 4
    %v306 = vadd.f32 %v302, %v305
    %v307 = vrot.slane %v306, 2
    %v308 = vadd.f32 %v306, %v307
    %v309 = vrot.slane %v308, 1
    %v310 = vadd.f32 %v308, %v309
    %v311 = vrot.slane %v303, 4
    %v312 = vadd.f32 %v303, %v311
    %v313 = vrot.slane %v312, 2
    %v314 = vadd.f32 %v312, %v313
    %v315 = vrot.slane %v314, 1
    %v316 = vadd.f32 %v314, %v315
    %v317 = vrot.slane %v304, 4
    %v318 = vadd.f32 %v304, %v317
    %v319 = vrot.slane %v318, 2
    %v320 = vadd.f32 %v318, %v319
    %v321 = vrot.slane %v320, 1
    %v322 = vadd.f32 %v320, %v321
    %v323 = vmul.f32 %v310, %v298
    %v324 = vmul.f32 %v316, %v298
    %v325 = vmul.f32 %v322, %v298
    %v326 = vmul.f32 %v299, %v299
    %v327 = vmul.f32 %v300, %v300
    %v328 = vmul.f32 %v301, %v301
    %v329 = vsub.f32 %v323, %v326
    %v330 = vsub.f32 %v324, %v327
    %v331 = vsub.f32 %v325, %v328
    %v332 = vsub.f32 %v275, %v299
    %v333 = vsub.f32 %v277, %v300
    %v334 = vsub.f32 %v279, %v301
    %v335 = vadd.f32 %v329, 1e-05
    %v336 = vadd.f32 %v330, 1e-05
    %v337 = vadd.f32 %v331, 1e-05
    %v338 = vrsqrt.pop %v335
    %v339 = vrsqrt.pop %v336
    %v340 = vrsqrt.pop %v337
    %v341 = vmul.f32 %v332, %v338
    %v342 = vmul.f32 %v333, %v339
    %v343 = vmul.f32 %v334, %v340
    %v344 = vld [vmem:[%s8] sm:$0x7]
    %v346 = vlaneseq
    %v347 = vshrl.u32 %v346, 7
    %v348 = vsub.s32 0, %v347
    %v349 = vrot.slane %v344, %v348
    %v350 = vlaneseq
    %v351 = vshrl.u32 %v350, 7
    %v352 = vsub.s32 1, %v351
    %v353 = vrot.slane %v344, %v352
    %v354 = vlaneseq
    %v355 = vshrl.u32 %v354, 7
    %v356 = vsub.s32 2, %v355
    %v357 = vrot.slane %v344, %v356
    %v361 = vmul.f32 %v341, %v349
    %v362 = vmul.f32 %v342, %v353
    %v363 = vmul.f32 %v343, %v357
    %v364 = vld [vmem:[%s9] sm:$0x7]
    %v366 = vlaneseq
    %v367 = vshrl.u32 %v366, 7
    %v368 = vsub.s32 0, %v367
    %v369 = vrot.slane %v364, %v368
    %v370 = vlaneseq
    %v371 = vshrl.u32 %v370, 7
    %v372 = vsub.s32 1, %v371
    %v373 = vrot.slane %v364, %v372
    %v374 = vlaneseq
    %v375 = vshrl.u32 %v374, 7
    %v376 = vsub.s32 2, %v375
    %v377 = vrot.slane %v364, %v376
    %v381 = vadd.f32 %v361, %v369
    %v382 = vadd.f32 %v362, %v373
    %v383 = vadd.f32 %v363, %v377
    %v384 = vld [vmem:[%s10] sm:$0xff]
    %v385 = vld [vmem:[%s10 + $0x8] sm:$0xff]
    %v386 = vld [vmem:[%s10 + $0x10] sm:$0xff]
    %v387 = vld [vmem:[%s10 + $0x18] sm:$0xff]
    %v388 = vld [vmem:[%s10 + $0x20] sm:$0xff]
    %v389 = vld [vmem:[%s10 + $0x28] sm:$0xff]
    %v390 = vld [vmem:[%s10 + $0x30] sm:$0xff]
    %v391 = vld [vmem:[%s10 + $0x38] sm:$0xff]
    %v392 = vld [vmem:[%s10 + $0x40] sm:$0xff]
    %v393 = vld [vmem:[%s10 + $0x48] sm:$0xff]
    %v394 = vld [vmem:[%s10 + $0x50] sm:$0xff]
    %v395 = vld [vmem:[%s10 + $0x58] sm:$0xff]
    %v396 = vld [vmem:[%s10 + $0x60] sm:$0xff]
    %v397 = vld [vmem:[%s10 + $0x68] sm:$0xff]
    %v398 = vld [vmem:[%s10 + $0x70] sm:$0xff]
    %v399 = vld [vmem:[%s10 + $0x78] sm:$0xff]
    %v400 = vld [vmem:[%s10 + $0x80] sm:$0xff]
    %v401 = vld [vmem:[%s10 + $0x88] sm:$0xff]
    %v402 = vld [vmem:[%s10 + $0x90] sm:$0xff]
    %v403 = vld [vmem:[%s10 + $0x98] sm:$0xff]
    %v404 = vld [vmem:[%s10 + $0xa0] sm:$0xff]
    %v405 = vld [vmem:[%s10 + $0xa8] sm:$0xff]
    %v406 = vld [vmem:[%s10 + $0xb0] sm:$0xff]
    %v407 = vld [vmem:[%s10 + $0xb8] sm:$0xff]
    %v408 = vld [vmem:[%s10 + $0xc0] sm:$0xff]
    %v409 = vld [vmem:[%s10 + $0xc8] sm:$0xff]
    %v410 = vld [vmem:[%s10 + $0xd0] sm:$0xff]
    %v411 = vld [vmem:[%s10 + $0xd8] sm:$0xff]
    %v412 = vld [vmem:[%s10 + $0xe0] sm:$0xff]
    %v413 = vld [vmem:[%s10 + $0xe8] sm:$0xff]
    %v414 = vld [vmem:[%s10 + $0xf0] sm:$0xff]
    %v415 = vld [vmem:[%s10 + $0xf8] sm:$0xff]
    %v416 = vld [vmem:[%s10 + $0x100] sm:$0xff]
    %v417 = vld [vmem:[%s10 + $0x108] sm:$0xff]
    %v418 = vld [vmem:[%s10 + $0x110] sm:$0xff]
    %v419 = vld [vmem:[%s10 + $0x118] sm:$0xff]
    %v420 = vld [vmem:[%s10 + $0x120] sm:$0xff]
    %v421 = vld [vmem:[%s10 + $0x128] sm:$0xff]
    %v422 = vld [vmem:[%s10 + $0x130] sm:$0xff]
    %v423 = vld [vmem:[%s10 + $0x138] sm:$0xff]
    %v424 = vld [vmem:[%s10 + $0x140] sm:$0xff]
    %v425 = vld [vmem:[%s10 + $0x148] sm:$0xff]
    %v426 = vld [vmem:[%s10 + $0x150] sm:$0xff]
    %v427 = vld [vmem:[%s10 + $0x158] sm:$0xff]
    %v428 = vld [vmem:[%s10 + $0x160] sm:$0xff]
    %v429 = vld [vmem:[%s10 + $0x168] sm:$0xff]
    %v430 = vld [vmem:[%s10 + $0x170] sm:$0xff]
    %v431 = vld [vmem:[%s10 + $0x178] sm:$0xff]
    %v432 = vld [vmem:[%s11] sm:$0x1]
    %v434 = vlaneseq
    %v435 = vshrl.u32 %v434, 7
    %v436 = vsub.s32 0, %v435
    %v437 = vrot.slane %v432, %v436
    %439 = vmatprep.subr.mxu0 0.0
    %440 = vmatpush1.msra.mxu0 %v399
    %441 = vmatprep.subr.mxu0 0.0
    %442 = vmatpush1.msra.mxu0 %v398
    %443 = vmatprep.subr.mxu0 0.0
    %444 = vmatpush1.msra.mxu0 %v397
    %445 = vmatprep.subr.mxu0 0.0
    %446 = vmatpush1.msra.mxu0 %v396
    %447 = vmatprep.subr.mxu0 0.0
    %448 = vmatpush1.msra.mxu0 %v395
    %449 = vmatprep.subr.mxu0 0.0
    %450 = vmatpush1.msra.mxu0 %v394
    %451 = vmatprep.subr.mxu0 0.0
    %452 = vmatpush1.msra.mxu0 %v393
    %453 = vmatprep.subr.mxu0 0.0
    %454 = vmatpush1.msra.mxu0 %v392
    %455 = vmatprep.subr.mxu0 0.0
    %456 = vmatpush1.msra.mxu0 %v391
    %457 = vmatprep.subr.mxu0 0.0
    %458 = vmatpush1.msra.mxu0 %v390
    %459 = vmatprep.subr.mxu0 0.0
    %460 = vmatpush1.msra.mxu0 %v389
    %461 = vmatprep.subr.mxu0 0.0
    %462 = vmatpush1.msra.mxu0 %v388
    %463 = vmatprep.subr.mxu0 0.0
    %464 = vmatpush1.msra.mxu0 %v387
    %465 = vmatprep.subr.mxu0 0.0
    %466 = vmatpush1.msra.mxu0 %v386
    %467 = vmatprep.subr.mxu0 0.0
    %468 = vmatpush1.msra.mxu0 %v385
    %469 = vmatprep.subr.mxu0 0.0
    %470 = vmatpush1.msra.mxu0 %v384
    %471 = vmatprep.subr.mxu0 0.0
    %472 = vmatpush2.msra.mxu0 %v415
    %473 = vmatprep.subr.mxu0 0.0
    %474 = vmatpush2.msra.mxu0 %v414
    %475 = vmatprep.subr.mxu0 0.0
    %476 = vmatpush2.msra.mxu0 %v413
    %477 = vmatprep.subr.mxu0 0.0
    %478 = vmatpush2.msra.mxu0 %v412
    %479 = vmatprep.subr.mxu0 0.0
    %480 = vmatpush2.msra.mxu0 %v411
    %481 = vmatprep.subr.mxu0 0.0
    %482 = vmatpush2.msra.mxu0 %v410
    %483 = vmatprep.subr.mxu0 0.0
    %484 = vmatpush2.msra.mxu0 %v409
    %485 = vmatprep.subr.mxu0 0.0
    %486 = vmatpush2.msra.mxu0 %v408
    %487 = vmatprep.subr.mxu0 0.0
    %488 = vmatpush2.msra.mxu0 %v407
    %489 = vmatprep.subr.mxu0 0.0
    %490 = vmatpush2.msra.mxu0 %v406
    %491 = vmatprep.subr.mxu0 0.0
    %492 = vmatpush2.msra.mxu0 %v405
    %493 = vmatprep.subr.mxu0 0.0
    %494 = vmatpush2.msra.mxu0 %v404
    %495 = vmatprep.subr.mxu0 0.0
    %496 = vmatpush2.msra.mxu0 %v403
    %497 = vmatprep.subr.mxu0 0.0
    %498 = vmatpush2.msra.mxu0 %v402
    %499 = vmatprep.subr.mxu0 0.0
    %500 = vmatpush2.msra.mxu0 %v401
    %501 = vmatprep.subr.mxu0 0.0
    %502 = vmatpush2.msra.mxu0 %v400
    %503 = vmatprep.mubr.f32.mxu0 %v382
    %504 = vmatmul.mubr.f32.gmra.mxu0 %v381
    %v505 = vpop.f32.mrf.mxu0
    %v506 = vadd.f32 %v437, %v505
    %v507 = vpop.f32.mrf.mxu0
    %508 = vdwg.mxu0
    %509 = vmatprep.subr.mxu0 0.0
    %510 = vmatpush1.msra.mxu0 %v431
    %511 = vmatprep.subr.mxu0 0.0
    %512 = vmatpush1.msra.mxu0 %v430
    %513 = vmatprep.subr.mxu0 0.0
    %514 = vmatpush1.msra.mxu0 %v429
    %515 = vmatprep.subr.mxu0 0.0
    %516 = vmatpush1.msra.mxu0 %v428
    %517 = vmatprep.subr.mxu0 0.0
    %518 = vmatpush1.msra.mxu0 %v427
    %519 = vmatprep.subr.mxu0 0.0
    %520 = vmatpush1.msra.mxu0 %v426
    %521 = vmatprep.subr.mxu0 0.0
    %522 = vmatpush1.msra.mxu0 %v425
    %523 = vmatprep.subr.mxu0 0.0
    %524 = vmatpush1.msra.mxu0 %v424
    %525 = vmatprep.subr.mxu0 0.0
    %526 = vmatpush1.msra.mxu0 %v423
    %527 = vmatprep.subr.mxu0 0.0
    %528 = vmatpush1.msra.mxu0 %v422
    %529 = vmatprep.subr.mxu0 0.0
    %530 = vmatpush1.msra.mxu0 %v421
    %531 = vmatprep.subr.mxu0 0.0
    %532 = vmatpush1.msra.mxu0 %v420
    %533 = vmatprep.subr.mxu0 0.0
    %534 = vmatpush1.msra.mxu0 %v419
    %535 = vmatprep.subr.mxu0 0.0
    %536 = vmatpush1.msra.mxu0 %v418
    %537 = vmatprep.subr.mxu0 0.0
    %538 = vmatpush1.msra.mxu0 %v417
    %539 = vmatprep.subr.mxu0 0.0
    %540 = vmatpush1.msra.mxu0 %v416
    %541 = vmatprep.subr.mxu0 0.0
    %542 = vmatpush2.msra.mxu0 0.0
    %543 = vmatprep.subr.mxu0 0.0
    %544 = vmatpush2.msra.mxu0 0.0
    %545 = vmatprep.subr.mxu0 0.0
    %546 = vmatpush2.msra.mxu0 0.0
    %547 = vmatprep.subr.mxu0 0.0
    %548 = vmatpush2.msra.mxu0 0.0
    %549 = vmatprep.subr.mxu0 0.0
    %550 = vmatpush2.msra.mxu0 0.0
    %551 = vmatprep.subr.mxu0 0.0
    %552 = vmatpush2.msra.mxu0 0.0
    %553 = vmatprep.subr.mxu0 0.0
    %554 = vmatpush2.msra.mxu0 0.0
    %555 = vmatprep.subr.mxu0 0.0
    %556 = vmatpush2.msra.mxu0 0.0
    %557 = vmatprep.subr.mxu0 0.0
    %558 = vmatpush2.msra.mxu0 0.0
    %559 = vmatprep.subr.mxu0 0.0
    %560 = vmatpush2.msra.mxu0 0.0
    %561 = vmatprep.subr.mxu0 0.0
    %562 = vmatpush2.msra.mxu0 0.0
    %563 = vmatprep.subr.mxu0 0.0
    %564 = vmatpush2.msra.mxu0 0.0
    %565 = vmatprep.subr.mxu0 0.0
    %566 = vmatpush2.msra.mxu0 0.0
    %567 = vmatprep.subr.mxu0 0.0
    %568 = vmatpush2.msra.mxu0 0.0
    %569 = vmatprep.subr.mxu0 0.0
    %570 = vmatpush2.msra.mxu0 0.0
    %571 = vmatprep.subr.mxu0 0.0
    %572 = vmatpush2.msra.mxu0 0.0
    %573 = vmatprep.mubr.f32.mxu0 0.0
    %574 = vmatmul.mubr.f32.gmra.mxu0 %v383
    %v575 = vpop.f32.mrf.mxu0
    %v576 = vadd.f32 %v506, %v575
    %v577 = vpop.f32.mrf.mxu0
    %578 = vdwg.mxu0
    %vm579 = vcmask 130048
    %v580 = vsel %vm579, %v576, -inf
    %581 = vmax.xlane.f32.xlu0 %v580
    %v582 = vpop.xlane.xlu0 %581
    %v583 = vsub.f32 %v576, %v582
    %v584 = vmul.f32 %v583, 1.442695
    %v585 = vpow.pop %v584
    %v586 = vsel %vm579, %v585, 0.0
    %587 = vadd.xlane.f32.xlu0 %v586
    %v588 = vpop.xlane.xlu0 %587
    %v589 = vrcp.pop %v588
    %v590 = vmul.f32 %v585, %v589
    %v591 = vmax.f32 %v576, 0.0
    %vm592 = vcmp.ne.f32.partialorder %v576, %v576
    %v593 = vadd.f32 %v576, 0.0
    %v594 = vand.u32 2147483647, %v576
    %v595 = vsub.f32 0.0, %v594
    %v596 = vmul.f32 %v595, 1.442695
    %v597 = vpow.pop %v596
    %v598 = vadd.f32 %v597, 1.0
    %v599 = vlog2.pop %v598
    %v600 = vmul.f32 %v599, 0.6931472
    %v601 = vmul.f32 -0.5, %v597
    %v602 = vadd.f32 %v601, 1.0
    %v603 = vmul.f32 %v602, %v597
    %v604 = vand.u32 2147483647, %v597
    %vm605 = vcmp.lt.f32.partialorder %v604, 0.0004427343
    %v606 = vsel %vm605, %v603, %v600
    %v607 = vadd.f32 %v591, %v606
    %v608 = vsel %vm592, %v593, %v607
    %610 = vrot.lane.b32.xlu0 %v54, 22
    %v611 = vpop.permute.xlu0 %610
    %v613 = vmul.f32 %v608, %v611
    %615 = vrot.lane.b32.xlu0 %v613, 122
    %v616 = vpop.permute.xlu0 %615
    %v618 = vadd.f32 %v576, %v616
    %619 = vrot.lane.b32.xlu0 %v71, 3
    %v620 = vpop.permute.xlu0 %619
    %623 = vrot.lane.b32.xlu0 %v618, 117
    %v624 = vpop.permute.xlu0 %623
    %v626 = vsel %vm80, %v52, %v620
    %vm627 = vcmask 39936
    %v628 = vsel %vm627, %v626, %v624
    %v629 = vld [vmem:[%s12] sm:$0xff]
    %v630 = vld [vmem:[%s12 + $0x8] sm:$0xff]
    %v632 = vsel %vm579, %v590, 0
    %634 = vmatprep.subr.mxu0 0.0
    %635 = vmatpush1.msra.mxu0 0.0
    %636 = vmatprep.subr.mxu0 0.0
    %637 = vmatpush1.msra.mxu0 0.0
    %638 = vmatprep.subr.mxu0 0.0
    %639 = vmatpush1.msra.mxu0 0.0
    %640 = vmatprep.subr.mxu0 0.0
    %641 = vmatpush1.msra.mxu0 0.0
    %642 = vmatprep.subr.mxu0 0.0
    %643 = vmatpush1.msra.mxu0 0.0
    %644 = vmatprep.subr.mxu0 0.0
    %645 = vmatpush1.msra.mxu0 0.0
    %646 = vmatprep.subr.mxu0 0.0
    %647 = vmatpush1.msra.mxu0 0.0
    %648 = vmatprep.subr.mxu0 0.0
    %649 = vmatpush1.msra.mxu0 0.0
    %650 = vmatprep.subr.mxu0 0.0
    %651 = vmatpush1.msra.mxu0 0.0
    %652 = vmatprep.subr.mxu0 0.0
    %653 = vmatpush1.msra.mxu0 0.0
    %654 = vmatprep.subr.mxu0 0.0
    %655 = vmatpush1.msra.mxu0 0.0
    %656 = vmatprep.subr.mxu0 0.0
    %657 = vmatpush1.msra.mxu0 0.0
    %658 = vmatprep.subr.mxu0 0.0
    %659 = vmatpush1.msra.mxu0 0.0
    %660 = vmatprep.subr.mxu0 0.0
    %661 = vmatpush1.msra.mxu0 0.0
    %662 = vmatprep.subr.mxu0 0.0
    %663 = vmatpush1.msra.mxu0 %v630
    %664 = vmatprep.subr.mxu0 0.0
    %665 = vmatpush1.msra.mxu0 %v629
    %666 = vmatprep.subr.mxu0 0.0
    %667 = vmatpush2.msra.mxu0 0.0
    %668 = vmatprep.subr.mxu0 0.0
    %669 = vmatpush2.msra.mxu0 0.0
    %670 = vmatprep.subr.mxu0 0.0
    %671 = vmatpush2.msra.mxu0 0.0
    %672 = vmatprep.subr.mxu0 0.0
    %673 = vmatpush2.msra.mxu0 0.0
    %674 = vmatprep.subr.mxu0 0.0
    %675 = vmatpush2.msra.mxu0 0.0
    %676 = vmatprep.subr.mxu0 0.0
    %677 = vmatpush2.msra.mxu0 0.0
    %678 = vmatprep.subr.mxu0 0.0
    %679 = vmatpush2.msra.mxu0 0.0
    %680 = vmatprep.subr.mxu0 0.0
    %681 = vmatpush2.msra.mxu0 0.0
    %682 = vmatprep.subr.mxu0 0.0
    %683 = vmatpush2.msra.mxu0 0.0
    %684 = vmatprep.subr.mxu0 0.0
    %685 = vmatpush2.msra.mxu0 0.0
    %686 = vmatprep.subr.mxu0 0.0
    %687 = vmatpush2.msra.mxu0 0.0
    %688 = vmatprep.subr.mxu0 0.0
    %689 = vmatpush2.msra.mxu0 0.0
    %690 = vmatprep.subr.mxu0 0.0
    %691 = vmatpush2.msra.mxu0 0.0
    %692 = vmatprep.subr.mxu0 0.0
    %693 = vmatpush2.msra.mxu0 0.0
    %694 = vmatprep.subr.mxu0 0.0
    %695 = vmatpush2.msra.mxu0 0.0
    %696 = vmatprep.subr.mxu0 0.0
    %697 = vmatpush2.msra.mxu0 0.0
    %698 = vmatprep.mubr.f32.mxu0 0.0
    %699 = vmatmul.mubr.f32.gmra.mxu0 %v632
    %v700 = vpop.f32.mrf.mxu0
    %v701 = vadd.f32 0.0, %v700
    %v702 = vpop.f32.mrf.mxu0
    %703 = vdwg.mxu0
    %705 = vrot.lane.b32.xlu0 %v628, 11
    %v706 = vpop.permute.xlu0 %705
    %708 = vrot.lane.b32.xlu0 %v628, 22
    %v709 = vpop.permute.xlu0 %708
    %vm711 = vcmask 89088
    %v712 = vsel %vm711, %v628, %v706
    %vm713 = vcmask 179200
    %v714 = vsel %vm713, %v712, %v709
    %v715 = vmul.f32 %v701, %v714
    %v716 = vsel %vm711, %v715, 0.0
    %717 = vadd.xlane.f32.xlu0 %v716
    %v718 = vpop.xlane.xlu0 %717
    %720 = vrot.lane.b32.xlu0 %v715, 117
    %v721 = vpop.permute.xlu0 %720
    %v723 = vsel %vm711, %v721, 0.0
    %724 = vadd.xlane.f32.xlu0 %v723
    %v725 = vpop.xlane.xlu0 %724
    %726 = vrot.lane.b32.xlu0 %v715, 106
    %v727 = vpop.permute.xlu0 %726
    %v729 = vsel %vm711, %v727, 0.0
    %730 = vadd.xlane.f32.xlu0 %v729
    %v731 = vpop.xlane.xlu0 %730
    %vm732 = vcmask 7168
    %v733 = vsel %vm732, %v718, %v725
    %vm734 = vcmask 15360
    %v735 = vsel %vm734, %v733, %v731
    %736 = vst.msk [vmem:[#allocation2] sm:$0xff] %vm80, %v735
    %738 = vrot.lane.b32.xlu0 %v576, 115
    %v739 = vpop.permute.xlu0 %738
    %742 = vrot.lane.b32.xlu0 %v608, 115
    %v743 = vpop.permute.xlu0 %742
    %v745 = vsel %vm80, %v735, %v739
    %v746 = vsel %vm107, %v745, %v743
    %vm747 = vcmask 121856
    %v748 = vsel %vm747, %v746, 0.0
    %749 = vst.msk [vmem:[#allocation3] sm:$0xff] %vm579, %v748
    // Predicated region
    $region58: #{tpu_custom_call.1} parent=1 // pred_check
      _
    $region59: #{tpu_custom_call.1} parent=1 // pred_check_branch
      %751 = sbr.rel (0) target = $region61
    $region60: #{tpu_custom_call.1} parent=1 // pred_region
      %s753 = ssub.s32 128, 128
      %754 = vsyncadd [#allocation4], %s753
      %s756 = sshll.u32 [#allocation3], 4
      %s757 = int_to_ptr.vmem [resolvable:$true] %s756
      %759 = dma.vmem_to_hbm [thread:$0]  %s757, 128, %s13, [#allocation4]
    $region61: #{tpu_custom_call.1} parent=1 // pred_fallthru
      _
    // Predicated region
    $region62: #{tpu_custom_call.1} parent=1 // pred_check
      _
    $region63: #{tpu_custom_call.1} parent=1 // pred_check_branch
      %761 = sbr.rel (0) target = $region65
    $region64: #{tpu_custom_call.1} parent=1 // pred_region
      %762 = dma.done [#allocation4], 128
    $region65: #{tpu_custom_call.1} parent=1 // pred_fallthru
      _
    %763 = vsyncpa [#allocation4], 1

</llo_original>
